<compile_context>
chip_gen: v5e
topology: v5e:2x2
jax: 0.10.0
libtpu: 0.0.40
codegen_flags: <defaults>
</compile_context>

<pallas_src>
import math
import jax
import jax.numpy as jnp
from jax.experimental import pallas as pl
from jax.experimental.pallas import tpu as pltpu

_INV_SQRT2 = 1.0 / math.sqrt(2.0)


def mlp_kernel(x_ref, g_ref, beta_ref, w1_ref, b1_ref, w2_ref, b2_ref,
               o_ref, xn_sc, acc_sc):
    k = pl.program_id(1)  # hidden-dim (M) reduction step

    @pl.when(k == 0)
    def _init():
        # ---- LayerNorm over E (eps=1e-5, elementwise affine), f32 stats ----
        x = x_ref[...].astype(jnp.float32)
        mean = jnp.mean(x, axis=-1, keepdims=True)
        var = jnp.mean((x - mean) ** 2, axis=-1, keepdims=True)
        xn = (x - mean) * jax.lax.rsqrt(var + 1e-5)
        xn = xn * g_ref[...].astype(jnp.float32) + beta_ref[...].astype(jnp.float32)
        xn_sc[...] = xn.astype(xn_sc.dtype)        # bf16 LHS, reused for every M chunk
        acc_sc[...] = jnp.zeros_like(acc_sc)

    # ---- Linear(E -> M chunk): bf16 x bf16 -> f32 accumulate on the MXU ----
    h = jnp.dot(xn_sc[...], w1_ref[...], preferred_element_type=jnp.float32)
    h = h + b1_ref[...].astype(jnp.float32)

    # Exact GELU (erf form) to match nn.GELU's default numerics.
    h = 0.5 * h * (1.0 + jax.lax.erf(h * _INV_SQRT2))

    # Dropout(p): identity in eval/inference mode.
    # TODO(synk): training-mode dropout (pltpu.prng_random_bits mask) not implemented.

    # ---- Linear(M chunk -> E), accumulated across M chunks in f32 ----
    acc_sc[...] += jnp.dot(h.astype(jnp.bfloat16), w2_ref[...],
                           preferred_element_type=jnp.float32)

    @pl.when(k == pl.num_programs(1) - 1)
    def _finalize():
        o_ref[...] = (acc_sc[...] + b2_ref[...].astype(jnp.float32)).astype(o_ref.dtype)


def _round_up(a, b):
    return (a + b - 1) // b * b


def mlp_forward(x, gamma, beta, w1, b1, w2, b2, *, tm=256, tk_m=None):
    """x: (B, S, E). Returns (B, S, E)."""
    B, S, E = x.shape
    E_, M = w1.shape
    assert E_ == E

    # Hidden-dim tile: bounds weight-resident VMEM at ViT scale (E=768, M=3072),
    # collapses to a single step for small M. Must be 128-aligned or the full M.
    if tk_m is None:
        tk_m = 512 if (M > 512 and M % 512 == 0) else M
    assert M % tk_m == 0
    assert tk_m == M or tk_m % 128 == 0

    N = B * S
    tm = min(tm, _round_up(N, 8))
    n_pad = _round_up(N, tm)

    x2d = x.reshape(N, E)
    if n_pad != N:
        x2d = jnp.pad(x2d, ((0, n_pad - N), (0, 0)))

    # Weights feed the MXU in bf16; LN affine and biases stay f32.
    w1b = w1.astype(jnp.bfloat16)
    w2b = w2.astype(jnp.bfloat16)
    gamma = gamma.astype(jnp.float32)
    beta = beta.astype(jnp.float32)
    b1 = b1.astype(jnp.float32)
    b2 = b2.astype(jnp.float32)

    grid = (n_pad // tm, M // tk_m)

    cost = pl.CostEstimate(
        flops=4 * n_pad * E * M,                 # two N x E x M matmuls
        transcendentals=n_pad * M,               # erf per hidden activation
        bytes_accessed=(x2d.size * x2d.dtype.itemsize
                        + n_pad * E * x.dtype.itemsize
                        + (w1b.size + w2b.size) * 2
                        + (gamma.size + beta.size + b1.size + b2.size) * 4),
    )

    out = pl.pallas_call(
        mlp_kernel,
        out_shape=jax.ShapeDtypeStruct((n_pad, E), x.dtype),
        grid_spec=pltpu.PrefetchScalarGridSpec(
            num_scalar_prefetch=0,
            grid=grid,
            in_specs=[
                pl.BlockSpec((tm, E), lambda i, k: (i, 0)),     # x tile
                pl.BlockSpec((1, E), lambda i, k: (0, 0)),      # ln gamma
                pl.BlockSpec((1, E), lambda i, k: (0, 0)),      # ln beta
                pl.BlockSpec((E, tk_m), lambda i, k: (0, k)),   # W1 chunk
                pl.BlockSpec((1, tk_m), lambda i, k: (0, k)),   # b1 chunk
                pl.BlockSpec((tk_m, E), lambda i, k: (k, 0)),   # W2 chunk
                pl.BlockSpec((1, E), lambda i, k: (0, 0)),      # b2
            ],
            out_specs=pl.BlockSpec((tm, E), lambda i, k: (i, 0)),
            scratch_shapes=[
                pltpu.VMEM((tm, E), jnp.bfloat16),   # cached LayerNorm output
                pltpu.VMEM((tm, E), jnp.float32),    # f32 output accumulator
            ],
        ),
        compiler_params=pltpu.CompilerParams(
            dimension_semantics=("parallel", "arbitrary")),
        cost_estimate=cost,
    )(x2d, gamma, beta, w1b, b1, w2b, b2)

    return out[:N].reshape(B, S, E)


if __name__ == "__main__":
    # Small shapes consistent with a transformer MLP block.
    B, S, E, M = 2, 8, 32, 64
    key = jax.random.PRNGKey(0)
    kx, k1, k2, k3, k4 = jax.random.split(key, 5)

    x = jax.random.normal(kx, (B, S, E), dtype=jnp.float32)

    # Deterministic synthetic parameters (shapes from the module __init__).
    gamma = jnp.ones((1, E), dtype=jnp.float32)        # LayerNorm weight
    beta = jnp.zeros((1, E), dtype=jnp.float32)        # LayerNorm bias
    w1 = jax.random.normal(k1, (E, M), dtype=jnp.float32) * 0.02
    b1 = jax.random.normal(k2, (1, M), dtype=jnp.float32) * 0.02
    w2 = jax.random.normal(k3, (M, E), dtype=jnp.float32) * 0.02
    b2 = jax.random.normal(k4, (1, E), dtype=jnp.float32) * 0.02

    y = mlp_forward(x, gamma, beta, w1, b1, w2, b2)
    jax.block_until_ready(y)

    # Pure-JAX f32 reference (kernel uses bf16 matmuls with f32 accumulation,
    # hence the slightly loosened tolerance).
    def ref(x):
        mean = jnp.mean(x, axis=-1, keepdims=True)
        var = jnp.mean((x - mean) ** 2, axis=-1, keepdims=True)
        xn = (x - mean) / jnp.sqrt(var + 1e-5) * gamma[0] + beta[0]
        h = xn @ w1 + b1[0]
        h = 0.5 * h * (1.0 + jax.lax.erf(h / math.sqrt(2.0)))
        return h @ w2 + b2[0]

    y_ref = ref(x)
    assert y.shape == y_ref.shape
    assert jnp.allclose(y, y_ref, atol=2e-3, rtol=2e-2), \
        float(jnp.max(jnp.abs(y - y_ref)))
    print("KERNEL_OK")
</pallas_src>

<mosaic_0001>
module attributes {stable_mosaic.version = 11 : i64} {
  func.func @mlp_kernel(%arg0: i32, %arg1: i32, %arg2: memref<16x32xf32, #tpu.memory_space<vmem>>, %arg3: memref<1x32xf32, #tpu.memory_space<vmem>>, %arg4: memref<1x32xf32, #tpu.memory_space<vmem>>, %arg5: memref<32x64xbf16, #tpu.memory_space<vmem>>, %arg6: memref<1x64xf32, #tpu.memory_space<vmem>>, %arg7: memref<64x32xbf16, #tpu.memory_space<vmem>>, %arg8: memref<1x32xf32, #tpu.memory_space<vmem>>, %arg9: memref<16x32xf32, #tpu.memory_space<vmem>>, %arg10: memref<16x32xbf16, #tpu.memory_space<vmem>>, %arg11: memref<16x32xf32, #tpu.memory_space<vmem>>) attributes {dimension_semantics = [#tpu.dimension_semantics<parallel>, #tpu.dimension_semantics<arbitrary>], iteration_bounds = array<i64: 1, 1>, scalar_prefetch = 0 : i64, scratch_operands = 2 : i64, tpu.core_type = #tpu.core_type<tc>, window_params = [{transform_indices = @transform_0, window_bounds = array<i64: 16, 32>}, {pipeline_mode = #tpu.pipeline_mode<synchronous>, transform_indices = @transform_1, window_bounds = array<i64: 1, 32>}, {pipeline_mode = #tpu.pipeline_mode<synchronous>, transform_indices = @transform_2, window_bounds = array<i64: 1, 32>}, {transform_indices = @transform_3, window_bounds = array<i64: 32, 64>}, {transform_indices = @transform_4, window_bounds = array<i64: 1, 64>}, {transform_indices = @transform_5, window_bounds = array<i64: 64, 32>}, {pipeline_mode = #tpu.pipeline_mode<synchronous>, transform_indices = @transform_6, window_bounds = array<i64: 1, 32>}, {transform_indices = @transform_7, window_bounds = array<i64: 16, 32>}]} {
    %c0_i32 = arith.constant 0 : i32
    %0 = arith.cmpi eq, %arg1, %c0_i32 : i32
    %1 = arith.extui %0 : i1 to i32
    %c0_i32_0 = arith.constant 0 : i32
    %2 = arith.cmpi ne, %1, %c0_i32_0 : i32
    scf.if %2 {
      %c0_18 = arith.constant 0 : index
      %c0_19 = arith.constant 0 : index
      %26 = vector.load %arg2[%c0_18, %c0_19] : memref<16x32xf32, #tpu.memory_space<vmem>>, vector<16x32xf32>
      %cst_20 = arith.constant dense<0.000000e+00> : vector<16xf32>
      %27 = vector.multi_reduction <add>, %26, %cst_20 [1] : vector<16x32xf32> to vector<16xf32>
      %28 = vector.shape_cast %27 : vector<16xf32> to vector<16x1xf32>
      %cst_21 = arith.constant 3.200000e+01 : f32
      %29 = vector.broadcast %cst_21 : f32 to vector<16x1xf32>
      %30 = arith.divf %28, %29 : vector<16x1xf32>
      %31 = vector.broadcast %30 : vector<16x1xf32> to vector<16x32xf32>
      %32 = arith.subf %26, %31 : vector<16x32xf32>
      %33 = arith.mulf %32, %32 : vector<16x32xf32>
      %cst_22 = arith.constant dense<0.000000e+00> : vector<16xf32>
      %34 = vector.multi_reduction <add>, %33, %cst_22 [1] : vector<16x32xf32> to vector<16xf32>
      %35 = vector.shape_cast %34 : vector<16xf32> to vector<16x1xf32>
      %cst_23 = arith.constant 3.200000e+01 : f32
      %36 = vector.broadcast %cst_23 : f32 to vector<16x1xf32>
      %37 = arith.divf %35, %36 : vector<16x1xf32>
      %38 = vector.broadcast %30 : vector<16x1xf32> to vector<16x32xf32>
      %39 = arith.subf %26, %38 : vector<16x32xf32>
      %cst_24 = arith.constant 9.99999974E-6 : f32
      %40 = vector.broadcast %cst_24 : f32 to vector<16x1xf32>
      %41 = arith.addf %37, %40 : vector<16x1xf32>
      %42 = math.rsqrt %41 : vector<16x1xf32>
      %43 = vector.broadcast %42 : vector<16x1xf32> to vector<16x32xf32>
      %44 = arith.mulf %39, %43 : vector<16x32xf32>
      %c0_25 = arith.constant 0 : index
      %c0_26 = arith.constant 0 : index
      %45 = vector.load %arg3[%c0_25, %c0_26] : memref<1x32xf32, #tpu.memory_space<vmem>>, vector<1x32xf32>
      %46 = vector.broadcast %45 : vector<1x32xf32> to vector<16x32xf32>
      %47 = arith.mulf %44, %46 : vector<16x32xf32>
      %c0_27 = arith.constant 0 : index
      %c0_28 = arith.constant 0 : index
      %48 = vector.load %arg4[%c0_27, %c0_28] : memref<1x32xf32, #tpu.memory_space<vmem>>, vector<1x32xf32>
      %49 = vector.broadcast %48 : vector<1x32xf32> to vector<16x32xf32>
      %50 = arith.addf %47, %49 : vector<16x32xf32>
      %51 = arith.truncf %50 : vector<16x32xf32> to vector<16x32xbf16>
      %c0_29 = arith.constant 0 : index
      %c0_30 = arith.constant 0 : index
      %52 = vector.load %arg10[%c0_29, %c0_30] : memref<16x32xbf16, #tpu.memory_space<vmem>>, vector<16x32xbf16>
      tpu.vector_store %arg10[%c0_29, %c0_30], %51 {strides = array<i32>} : memref<16x32xbf16, #tpu.memory_space<vmem>>, vector<16x32xbf16>,
      %cst_31 = arith.constant 0.000000e+00 : f32
      %53 = vector.broadcast %cst_31 : f32 to vector<16x32xf32>
      %c0_32 = arith.constant 0 : index
      %c0_33 = arith.constant 0 : index
      %54 = vector.load %arg11[%c0_32, %c0_33] : memref<16x32xf32, #tpu.memory_space<vmem>>, vector<16x32xf32>
      tpu.vector_store %arg11[%c0_32, %c0_33], %53 {strides = array<i32>} : memref<16x32xf32, #tpu.memory_space<vmem>>, vector<16x32xf32>,
    } else {
    }
    %c0 = arith.constant 0 : index
    %c0_1 = arith.constant 0 : index
    %3 = vector.load %arg10[%c0, %c0_1] : memref<16x32xbf16, #tpu.memory_space<vmem>>, vector<16x32xbf16>
    %c0_2 = arith.constant 0 : index
    %c0_3 = arith.constant 0 : index
    %4 = vector.load %arg5[%c0_2, %c0_3] : memref<32x64xbf16, #tpu.memory_space<vmem>>, vector<32x64xbf16>
    %cst = arith.constant dense<0.000000e+00> : vector<16x64xf32>
    %5 = tpu.matmul %3, %4, %cst {dimension_numbers = #tpu.dot_dimension_numbers<[1], [0], [0], [1], [0, 0, 1, 1], [], []>} : vector<16x32xbf16>, vector<32x64xbf16>, vector<16x64xf32> -> vector<16x64xf32>
    %c0_4 = arith.constant 0 : index
    %c0_5 = arith.constant 0 : index
    %6 = vector.load %arg6[%c0_4, %c0_5] : memref<1x64xf32, #tpu.memory_space<vmem>>, vector<1x64xf32>
    %7 = vector.broadcast %6 : vector<1x64xf32> to vector<16x64xf32>
    %8 = arith.addf %5, %7 : vector<16x64xf32>
    %cst_6 = arith.constant 5.000000e-01 : f32
    %9 = vector.broadcast %cst_6 : f32 to vector<16x64xf32>
    %10 = arith.mulf %9, %8 : vector<16x64xf32>
    %cst_7 = arith.constant 0.707106769 : f32
    %11 = vector.broadcast %cst_7 : f32 to vector<16x64xf32>
    %12 = arith.mulf %8, %11 : vector<16x64xf32>
    %13 = math.erf %12 : vector<16x64xf32>
    %cst_8 = arith.constant 1.000000e+00 : f32
    %14 = vector.broadcast %cst_8 : f32 to vector<16x64xf32>
    %15 = arith.addf %14, %13 : vector<16x64xf32>
    %16 = arith.mulf %10, %15 : vector<16x64xf32>
    %c0_9 = arith.constant 0 : index
    %c0_10 = arith.constant 0 : index
    %17 = vector.load %arg11[%c0_9, %c0_10] : memref<16x32xf32, #tpu.memory_space<vmem>>, vector<16x32xf32>
    %18 = arith.truncf %16 : vector<16x64xf32> to vector<16x64xbf16>
    %c0_11 = arith.constant 0 : index
    %c0_12 = arith.constant 0 : index
    %19 = vector.load %arg7[%c0_11, %c0_12] : memref<64x32xbf16, #tpu.memory_space<vmem>>, vector<64x32xbf16>
    %cst_13 = arith.constant dense<0.000000e+00> : vector<16x32xf32>
    %20 = tpu.matmul %18, %19, %cst_13 {dimension_numbers = #tpu.dot_dimension_numbers<[1], [0], [0], [1], [0, 0, 1, 1], [], []>} : vector<16x64xbf16>, vector<64x32xbf16>, vector<16x32xf32> -> vector<16x32xf32>
    %21 = arith.addf %17, %20 : vector<16x32xf32>
    %c0_14 = arith.constant 0 : index
    %c0_15 = arith.constant 0 : index
    %22 = vector.load %arg11[%c0_14, %c0_15] : memref<16x32xf32, #tpu.memory_space<vmem>>, vector<16x32xf32>
    tpu.vector_store %arg11[%c0_14, %c0_15], %21 {strides = array<i32>} : memref<16x32xf32, #tpu.memory_space<vmem>>, vector<16x32xf32>,
    %c0_i32_16 = arith.constant 0 : i32
    %23 = arith.cmpi eq, %arg1, %c0_i32_16 : i32
    %24 = arith.extui %23 : i1 to i32
    %c0_i32_17 = arith.constant 0 : i32
    %25 = arith.cmpi ne, %24, %c0_i32_17 : i32
    scf.if %25 {
      %c0_18 = arith.constant 0 : index
      %c0_19 = arith.constant 0 : index
      %26 = vector.load %arg11[%c0_18, %c0_19] : memref<16x32xf32, #tpu.memory_space<vmem>>, vector<16x32xf32>
      %c0_20 = arith.constant 0 : index
      %c0_21 = arith.constant 0 : index
      %27 = vector.load %arg8[%c0_20, %c0_21] : memref<1x32xf32, #tpu.memory_space<vmem>>, vector<1x32xf32>
      %28 = vector.broadcast %27 : vector<1x32xf32> to vector<16x32xf32>
      %29 = arith.addf %26, %28 : vector<16x32xf32>
      %c0_22 = arith.constant 0 : index
      %c0_23 = arith.constant 0 : index
      %30 = vector.load %arg9[%c0_22, %c0_23] : memref<16x32xf32, #tpu.memory_space<vmem>>, vector<16x32xf32>
      tpu.vector_store %arg9[%c0_22, %c0_23], %29 {strides = array<i32>} : memref<16x32xf32, #tpu.memory_space<vmem>>, vector<16x32xf32>,
    } else {
    }
    return
  }
  func.func @transform_0(%arg0: i32, %arg1: i32) -> (i32, i32) {
    %c0_i32 = arith.constant 0 : i32
    %c0_i32_0 = arith.constant 0 : i32
    return %arg0, %c0_i32 : i32, i32
  }
  func.func @transform_1(%arg0: i32, %arg1: i32) -> (i32, i32) {
    %c0_i32 = arith.constant 0 : i32
    %c0_i32_0 = arith.constant 0 : i32
    %c0_i32_1 = arith.constant 0 : i32
    return %c0_i32, %c0_i32_0 : i32, i32
  }
  func.func @transform_2(%arg0: i32, %arg1: i32) -> (i32, i32) {
    %c0_i32 = arith.constant 0 : i32
    %c0_i32_0 = arith.constant 0 : i32
    %c0_i32_1 = arith.constant 0 : i32
    return %c0_i32, %c0_i32_0 : i32, i32
  }
  func.func @transform_3(%arg0: i32, %arg1: i32) -> (i32, i32) {
    %c0_i32 = arith.constant 0 : i32
    %c0_i32_0 = arith.constant 0 : i32
    return %c0_i32, %arg1 : i32, i32
  }
  func.func @transform_4(%arg0: i32, %arg1: i32) -> (i32, i32) {
    %c0_i32 = arith.constant 0 : i32
    %c0_i32_0 = arith.constant 0 : i32
    return %c0_i32, %arg1 : i32, i32
  }
  func.func @transform_5(%arg0: i32, %arg1: i32) -> (i32, i32) {
    %c0_i32 = arith.constant 0 : i32
    %c0_i32_0 = arith.constant 0 : i32
    return %arg1, %c0_i32 : i32, i32
  }
  func.func @transform_6(%arg0: i32, %arg1: i32) -> (i32, i32) {
    %c0_i32 = arith.constant 0 : i32
    %c0_i32_0 = arith.constant 0 : i32
    %c0_i32_1 = arith.constant 0 : i32
    return %c0_i32, %c0_i32_0 : i32, i32
  }
  func.func @transform_7(%arg0: i32, %arg1: i32) -> (i32, i32) {
    %c0_i32 = arith.constant 0 : i32
    %c0_i32_0 = arith.constant 0 : i32
    return %arg0, %c0_i32 : i32, i32
  }
}

</mosaic_0001>

<llo_original>
// kernel: tpu_custom_call.1
$region0: #{tpu_custom_call.1}
  #allocation0 [shape = 'u32[]', space=smem, size = 0x4, offset = 0x4, fixed_abs, tag = 'smem constant byte address 0x4 - core index']
  #allocation1 [shape = 'u32[72,128]{1,0:T(1,128)}', space=vmem, size = 0x9000, scoped, tag = 'internal scratch']
  #allocation2 [shape = 'bf16[16,32]{1,0:T(8,128)(2,1)}', space=vmem, size = 0x1000, scoped, tag = 'scratch operand']
  #allocation3 [shape = 'f32[16,32]{1,0:T(8,128)}', space=vmem, size = 0x2000, scoped, tag = 'scratch operand']
  %s0 = inlined_call_operand.vmem [shape: f32[16,32], index: 0, kind: input, shape index: {}]
  %s1 = inlined_call_operand.vmem [shape: f32[1,32], index: 1, kind: input, shape index: {}]
  %s2 = inlined_call_operand.vmem [shape: f32[1,32], index: 2, kind: input, shape index: {}]
  %s3 = inlined_call_operand.vmem [shape: bf16[32,64], index: 3, kind: input, shape index: {}]
  %s4 = inlined_call_operand.vmem [shape: f32[1,64], index: 4, kind: input, shape index: {}]
  %s5 = inlined_call_operand.vmem [shape: bf16[64,32], index: 5, kind: input, shape index: {}]
  %s6 = inlined_call_operand.vmem [shape: f32[1,32], index: 6, kind: input, shape index: {}]
  %s7 = inlined_call_operand.hbm [shape: f32[16,32], index: 7, kind: output, shape index: {}]
  %s8 = sld [smem:[#allocation0]]
  $region46: #{tpu_custom_call.1} parent=0
    _
  %s10 = ssub.s32 1, %s8
  %s11 = scalar_select 0, %s10, %s8
  $region1: #{tpu_custom_call.1} parent=0
    #allocation4 [shape = 'u8[8192]{0}', space=vmem, size = 0x2000, scoped, tag = 'output window, operand 0, single buffered']
    #allocation5 [shape = 's32[1]{0}', space=sflag, size = 0x4, scoped, tag = 'scoped memory for tpu_custom_call.1']
    %12 = vsyncpa [#allocation5], 0
    // Predicated region
    $region2: #{tpu_custom_call.1} parent=1 // pred_check
      _
    $region3: #{tpu_custom_call.1} parent=1 // pred_check_branch
      %14 = sbr.rel (0) target = $region5
    $region4: #{tpu_custom_call.1} parent=1 // pred_region
      _
    $region5: #{tpu_custom_call.1} parent=1 // pred_fallthru
      _
    // Predicated region
    $region6: #{tpu_custom_call.1} parent=1 // pred_check
      _
    $region7: #{tpu_custom_call.1} parent=1 // pred_check_branch
      %16 = sbr.rel (0) target = $region9
    $region8: #{tpu_custom_call.1} parent=1 // pred_region
      _
    $region9: #{tpu_custom_call.1} parent=1 // pred_fallthru
      _
    // Predicated region
    $region10: #{tpu_custom_call.1} parent=1 // pred_check
      _
    $region11: #{tpu_custom_call.1} parent=1 // pred_check_branch
      %18 = sbr.rel (0) target = $region13
    $region12: #{tpu_custom_call.1} parent=1 // pred_region
      _
    $region13: #{tpu_custom_call.1} parent=1 // pred_fallthru
      _
    // Predicated region
    $region14: #{tpu_custom_call.1} parent=1 // pred_check
      _
    $region15: #{tpu_custom_call.1} parent=1 // pred_check_branch
      %20 = sbr.rel (0) target = $region17
    $region16: #{tpu_custom_call.1} parent=1 // pred_region
      _
    $region17: #{tpu_custom_call.1} parent=1 // pred_fallthru
      _
    // Predicated region
    $region18: #{tpu_custom_call.1} parent=1 // pred_check
      _
    $region19: #{tpu_custom_call.1} parent=1 // pred_check_branch
      %22 = sbr.rel (0) target = $region21
    $region20: #{tpu_custom_call.1} parent=1 // pred_region
      _
    $region21: #{tpu_custom_call.1} parent=1 // pred_fallthru
      _
    // Predicated region
    $region22: #{tpu_custom_call.1} parent=1 // pred_check
      _
    $region23: #{tpu_custom_call.1} parent=1 // pred_check_branch
      %24 = sbr.rel (0) target = $region25
    $region24: #{tpu_custom_call.1} parent=1 // pred_region
      _
    $region25: #{tpu_custom_call.1} parent=1 // pred_fallthru
      _
    // Predicated region
    $region26: #{tpu_custom_call.1} parent=1 // pred_check
      _
    $region27: #{tpu_custom_call.1} parent=1 // pred_check_branch
      %26 = sbr.rel (0) target = $region29
    $region28: #{tpu_custom_call.1} parent=1 // pred_region
      _
    $region29: #{tpu_custom_call.1} parent=1 // pred_fallthru
      _
    %p28 = scmp.eq.s32.totalorder 0, 0
    // Predicated region
    $region30: #{tpu_custom_call.1} parent=1 // pred_check
      %p29 = pneg %p28
    $region31: #{tpu_custom_call.1} parent=1 // pred_check_branch
      %31 = sbr.rel (%p29) target = $region33
    $region32: #{tpu_custom_call.1} parent=1 // pred_region
      %v32 = vld [vmem:[%s0] sm:$0xff]
      %v33 = vld [vmem:[%s0 + $0x8] sm:$0xff]
      %vm34 = vcmask 261120
      %v35 = vsel %vm34, %v32, 0.0
      %36 = vadd.xlane.f32.xlu0 %v35
      %v37 = vpop.xlane.xlu0 %36
      %v38 = vsel %vm34, %v33, 0.0
      %39 = vadd.xlane.f32.xlu0 %v38
      %v40 = vpop.xlane.xlu0 %39
      %v41 = vrcp.pop 32.0
      %v42 = vmul.f32 32.0, %v41
      %v43 = vsub.f32 1.0, %v42
      %v44 = vmul.f32 %v41, %v43
      %v45 = vadd.f32 %v41, %v44
      %vm46 = vweird.f32 %v41
      %v47 = vsel %vm46, %v41, %v45
      %v48 = vmul.f32 %v37, %v47
      %v49 = vmul.f32 %v40, %v47
      %v50 = vsub.f32 %v32, %v48
      %v51 = vsub.f32 %v33, %v49
      %v52 = vmul.f32 %v50, %v50
      %v53 = vmul.f32 %v51, %v51
      %v54 = vsel %vm34, %v52, 0.0
      %55 = vadd.xlane.f32.xlu0 %v54
      %v56 = vpop.xlane.xlu0 %55
      %v57 = vsel %vm34, %v53, 0.0
      %58 = vadd.xlane.f32.xlu0 %v57
      %v59 = vpop.xlane.xlu0 %58
      %v60 = vmul.f32 %v56, %v47
      %v61 = vmul.f32 %v59, %v47
      %v62 = vadd.f32 %v60, 1e-05
      %v63 = vadd.f32 %v61, 1e-05
      %v64 = vrsqrt.pop %v62
      %v65 = vmul.f32 %v64, %v62
      %v66 = vmul.f32 %v65, %v64
      %v67 = vmul.f32 0.5, %v66
      %v68 = vsub.f32 1.5, %v67
      %v69 = vmul.f32 %v64, %v68
      %vm70 = vweird.f32 %v62
      %vm71 = vweird.f32 %v64
      %vm72 = vmor %vm70, %vm71
      %v73 = vsel %vm72, %v64, %v69
      %v74 = vrsqrt.pop %v63
      %v75 = vmul.f32 %v74, %v63
      %v76 = vmul.f32 %v75, %v74
      %v77 = vmul.f32 0.5, %v76
      %v78 = vsub.f32 1.5, %v77
      %v79 = vmul.f32 %v74, %v78
      %vm80 = vweird.f32 %v63
      %vm81 = vweird.f32 %v74
      %vm82 = vmor %vm80, %vm81
      %v83 = vsel %vm82, %v74, %v79
      %v84 = vmul.f32 %v50, %v73
      %v85 = vmul.f32 %v51, %v83
      %v86 = vld [vmem:[%s1] sm:$0x1]
      %v88 = vperm.slane %v86, 0
      %v90 = vmul.f32 %v84, %v88
      %v91 = vmul.f32 %v85, %v88
      %v92 = vld [vmem:[%s2] sm:$0x1]
      %v94 = vperm.slane %v92, 0
      %v96 = vadd.f32 %v90, %v94
      %v97 = vadd.f32 %v91, %v94
      %v98 = vpack.c.bf16 %v96, %v96
      %v99 = vpack.c.bf16 %v97, %v97
      %vm100 = vcmask 257024
      %101 = vst.msk [vmem:[#allocation2] sm:$0xf] %vm100, %v98
      %102 = vst.msk [vmem:[#allocation2 + $0x4] sm:$0xf] %vm100, %v99
      %103 = vst.msk [vmem:[#allocation3] sm:$0xff] %vm34, 0.0
      %104 = vst.msk [vmem:[#allocation3 + $0x8] sm:$0xff] %vm34, 0.0
    $region33: #{tpu_custom_call.1} parent=1 // pred_fallthru
      _
    %v105 = vld [vmem:[#allocation2] sm:$0xf]
    %v106 = vld [vmem:[#allocation2 + $0x4] sm:$0xf]
    %v107 = vld [vmem:[%s3] sm:$0xf]
    %v108 = vld [vmem:[%s3 + $0x4] sm:$0xf]
    %v109 = vld [vmem:[%s3 + $0x8] sm:$0xf]
    %v110 = vld [vmem:[%s3 + $0xc] sm:$0xf]
    %v111 = vld [vmem:[%s4] sm:$0x1]
    %v113 = vperm.slane %v111, 0
    %v117 = vunpack.c.l.b16 %v105
    %v118 = vunpack.c.l.b16 %v106
    %v119 = vpack.c.b16 %v118, %v117
    %v124 = vunpack.c.l.b16 %v107
    %v125 = vunpack.c.l.b16 %v108
    %v126 = vunpack.c.l.b16 %v109
    %v127 = vunpack.c.l.b16 %v110
    %v128 = vpack.c.b16 %v125, %v124
    %v129 = vpack.c.b16 %v127, %v126
    %vm132 = vcmask 261120
    %v134 = vsel %vm132, %v119, 0
    %136 = vmatpush.bf16.msra.mxu0 0
    %137 = vmatpush.bf16.msra.mxu0 0
    %138 = vmatpush.bf16.msra.mxu0 0
    %139 = vmatpush.bf16.msra.mxu0 0
    %140 = vmatpush.bf16.msra.mxu0 0
    %141 = vmatpush.bf16.msra.mxu0 0
    %142 = vmatpush.bf16.msra.mxu0 %v129
    %143 = vmatpush.bf16.msra.mxu0 %v128
    %144 = vmatmul.bf16.gmra.mxu0 %v134
    %v145 = vpop.f32.mrf.mxu0
    %v146 = vadd.f32 %v113, %v145
    %v147 = vpop.f32.mrf.mxu0
    %v148 = vadd.f32 %v113, %v147
    %149 = vdwg.mxu0
    %v150 = vmul.f32 %v146, 0.5
    %v151 = vmul.f32 %v148, 0.5
    %v152 = vmul.f32 %v146, 0.70710677
    %v153 = vmul.f32 %v148, 0.70710677
    %v154 = vmul.f32 %v152, %v152
    %v155 = vmin.f32 16.0, %v154
    %v156 = vmul.f32 %v155, 2.1237322e-06
    %v157 = vadd.f32 %v156, 0.00028619796
    %v158 = vmul.f32 %v155, %v157
    %v159 = vadd.f32 %v158, 0.0036580483
    %v160 = vmul.f32 %v155, %v159
    %v161 = vadd.f32 %v160, 0.05243302
    %v162 = vmul.f32 %v155, %v161
    %v163 = vadd.f32 %v162, 0.18741608
    %v164 = vmul.f32 %v155, %v163
    %v165 = vadd.f32 %v164, 1.1283791
    %v166 = vmul.f32 %v152, %v165
    %v167 = vmul.f32 %v155, 3.8918573e-05
    %v168 = vadd.f32 %v167, 0.001143296
    %v169 = vmul.f32 %v155, %v168
    %v170 = vadd.f32 %v169, 0.014752088
    %v171 = vmul.f32 %v155, %v170
    %v172 = vadd.f32 %v171, 0.112945676
    %v173 = vmul.f32 %v155, %v172
    %v174 = vadd.f32 %v173, 0.4994258
    %v175 = vmul.f32 %v155, %v174
    %v176 = vadd.f32 %v175, 1.0
    %v177 = vrcp.pop %v176
    %v178 = vmul.f32 %v176, %v177
    %v179 = vsub.f32 1.0, %v178
    %v180 = vmul.f32 %v177, %v179
    %v181 = vadd.f32 %v177, %v180
    %vm182 = vweird.f32 %v176
    %vm183 = vweird.f32 %v177
    %vm184 = vmor %vm182, %vm183
    %v185 = vsel %vm184, %v177, %v181
    %v186 = vand.u32 2147483647, %v176
    %vm187 = vcmp.eq.f32.partialorder %v186, 8.507059e+37
    %v188 = vand.u32 %v176, 2147483648
    %v189 = vor.u32 1.1754944e-38, %v188
    %v190 = vsel %vm187, %v189, %v185
    %v191 = vmul.f32 %v166, %v190
    %v192 = vmin.f32 %v191, 1.0
    %v193 = vmax.f32 %v192, -1.0
    %v194 = vmul.f32 %v153, %v153
    %v195 = vmin.f32 16.0, %v194
    %v196 = vmul.f32 %v195, 2.1237322e-06
    %v197 = vadd.f32 %v196, 0.00028619796
    %v198 = vmul.f32 %v195, %v197
    %v199 = vadd.f32 %v198, 0.0036580483
    %v200 = vmul.f32 %v195, %v199
    %v201 = vadd.f32 %v200, 0.05243302
    %v202 = vmul.f32 %v195, %v201
    %v203 = vadd.f32 %v202, 0.18741608
    %v204 = vmul.f32 %v195, %v203
    %v205 = vadd.f32 %v204, 1.1283791
    %v206 = vmul.f32 %v153, %v205
    %v207 = vmul.f32 %v195, 3.8918573e-05
    %v208 = vadd.f32 %v207, 0.001143296
    %v209 = vmul.f32 %v195, %v208
    %v210 = vadd.f32 %v209, 0.014752088
    %v211 = vmul.f32 %v195, %v210
    %v212 = vadd.f32 %v211, 0.112945676
    %v213 = vmul.f32 %v195, %v212
    %v214 = vadd.f32 %v213, 0.4994258
    %v215 = vmul.f32 %v195, %v214
    %v216 = vadd.f32 %v215, 1.0
    %v217 = vrcp.pop %v216
    %v218 = vmul.f32 %v216, %v217
    %v219 = vsub.f32 1.0, %v218
    %v220 = vmul.f32 %v217, %v219
    %v221 = vadd.f32 %v217, %v220
    %vm222 = vweird.f32 %v216
    %vm223 = vweird.f32 %v217
    %vm224 = vmor %vm222, %vm223
    %v225 = vsel %vm224, %v217, %v221
    %v226 = vand.u32 2147483647, %v216
    %vm227 = vcmp.eq.f32.partialorder %v226, 8.507059e+37
    %v228 = vand.u32 %v216, 2147483648
    %v229 = vor.u32 1.1754944e-38, %v228
    %v230 = vsel %vm227, %v229, %v225
    %v231 = vmul.f32 %v206, %v230
    %v232 = vmin.f32 %v231, 1.0
    %v233 = vmax.f32 %v232, -1.0
    %v234 = vadd.f32 %v193, 1.0
    %v235 = vadd.f32 %v233, 1.0
    %v236 = vmul.f32 %v150, %v234
    %v237 = vmul.f32 %v151, %v235
    %v238 = vld [vmem:[#allocation3] sm:$0xff]
    %v239 = vld [vmem:[#allocation3 + $0x8] sm:$0xff]
    %v240 = vpack.c.bf16 %v237, %v236
    %v241 = vld [vmem:[%s5] sm:$0xf]
    %v242 = vld [vmem:[%s5 + $0x4] sm:$0xf]
    %v243 = vld [vmem:[%s5 + $0x8] sm:$0xf]
    %v244 = vld [vmem:[%s5 + $0xc] sm:$0xf]
    %v245 = vld [vmem:[%s5 + $0x10] sm:$0xf]
    %v246 = vld [vmem:[%s5 + $0x14] sm:$0xf]
    %v247 = vld [vmem:[%s5 + $0x18] sm:$0xf]
    %v248 = vld [vmem:[%s5 + $0x1c] sm:$0xf]
    %v257 = vunpack.c.l.b16 %v241
    %v258 = vunpack.c.l.b16 %v242
    %v259 = vunpack.c.l.b16 %v243
    %v260 = vunpack.c.l.b16 %v244
    %v261 = vunpack.c.l.b16 %v245
    %v262 = vunpack.c.l.b16 %v246
    %v263 = vunpack.c.l.b16 %v247
    %v264 = vunpack.c.l.b16 %v248
    %v265 = vpack.c.b16 %v258, %v257
    %v266 = vpack.c.b16 %v260, %v259
    %v267 = vpack.c.b16 %v262, %v261
    %v268 = vpack.c.b16 %v264, %v263
    %vm273 = vcmask 523264
    %v275 = vsel %vm273, %v240, 0
    %277 = vmatpush.bf16.msra.mxu0 0
    %278 = vmatpush.bf16.msra.mxu0 0
    %279 = vmatpush.bf16.msra.mxu0 0
    %280 = vmatpush.bf16.msra.mxu0 0
    %281 = vmatpush.bf16.msra.mxu0 %v268
    %282 = vmatpush.bf16.msra.mxu0 %v267
    %283 = vmatpush.bf16.msra.mxu0 %v266
    %284 = vmatpush.bf16.msra.mxu0 %v265
    %285 = vmatmul.bf16.gmra.mxu0 %v275
    %v286 = vpop.f32.mrf.mxu0
    %v287 = vadd.f32 0.0, %v286
    %v288 = vpop.f32.mrf.mxu0
    %v289 = vadd.f32 0.0, %v288
    %290 = vdwg.mxu0
    %v291 = vadd.f32 %v238, %v287
    %v292 = vadd.f32 %v239, %v289
    %293 = vst.msk [vmem:[#allocation3] sm:$0xff] %vm132, %v291
    %294 = vst.msk [vmem:[#allocation3 + $0x8] sm:$0xff] %vm132, %v292
    // Predicated region
    $region34: #{tpu_custom_call.1} parent=1 // pred_check
      %p295 = pneg %p28
    $region35: #{tpu_custom_call.1} parent=1 // pred_check_branch
      %297 = sbr.rel (%p295) target = $region37
    $region36: #{tpu_custom_call.1} parent=1 // pred_region
      %v298 = vld [vmem:[#allocation3] sm:$0xff]
      %v299 = vld [vmem:[#allocation3 + $0x8] sm:$0xff]
      %v300 = vld [vmem:[%s6] sm:$0x1]
      %v302 = vperm.slane %v300, 0
      %v304 = vadd.f32 %v298, %v302
      %v305 = vadd.f32 %v299, %v302
      %306 = vst.msk [vmem:[#allocation4] sm:$0xff] %vm132, %v304
      %307 = vst.msk [vmem:[#allocation4 + $0x8] sm:$0xff] %vm132, %v305
    $region37: #{tpu_custom_call.1} parent=1 // pred_fallthru
      _
    // Predicated region
    $region38: #{tpu_custom_call.1} parent=1 // pred_check
      _
    $region39: #{tpu_custom_call.1} parent=1 // pred_check_branch
      %309 = sbr.rel (0) target = $region41
    $region40: #{tpu_custom_call.1} parent=1 // pred_region
      %311 = vsyncadd [#allocation5], 0
      %s312 = sshll.u32 [#allocation4], 4
      %s313 = int_to_ptr.vmem [resolvable:$true] %s312
      %s314 = sshll.u32 %s7, 4
      %s315 = int_to_ptr.hbm [resolvable:$true] %s314
      %320 = dma.vmem_to_hbm [thread:$0]  %s313, 256, %s315, [#allocation5], 128, 128, 8
    $region41: #{tpu_custom_call.1} parent=1 // pred_fallthru
      _
    // Predicated region
    $region42: #{tpu_custom_call.1} parent=1 // pred_check
      _
    $region43: #{tpu_custom_call.1} parent=1 // pred_check_branch
      %322 = sbr.rel (0) target = $region45
    $region44: #{tpu_custom_call.1} parent=1 // pred_region
      %324 = dma.done [#allocation5], 256
    $region45: #{tpu_custom_call.1} parent=1 // pred_fallthru
      _
    %325 = vsyncpa [#allocation5], 1

</llo_original>
